<compile_context>
chip_gen: v5e
topology: v5e:2x2
jax: 0.10.0
libtpu: 0.0.40
codegen_flags: <defaults>
</compile_context>

<pallas_src>
import functools

import jax
import jax.numpy as jnp
from jax.experimental import pallas as pl
from jax.experimental.pallas import tpu as pltpu

# Arrays at or above this many bytes use multiple concurrent DMA chunks.
_CHUNK_THRESHOLD_BYTES = 16 * 1024 * 1024
_MAX_CHUNKS = 8


def _chunk_bounds(rows: int, num_chunks: int):
    """Static (start, size) pairs splitting `rows` into `num_chunks` pieces."""
    base, rem = divmod(rows, num_chunks)
    bounds = []
    start = 0
    for i in range(num_chunks):
        size = base + (1 if i < rem else 0)
        bounds.append((start, size))
        start += size
    return tuple(bounds)


@functools.lru_cache(maxsize=None)
def _build_copy(shape, dtype_name, num_chunks):
    """Build (and cache) a jitted Pallas HBM->HBM copy for one shape/dtype."""
    dtype = jnp.dtype(dtype_name)
    leading = shape[0] if len(shape) >= 1 else 1
    # Fall back to a single DMA if the array cannot be split along axis 0.
    if len(shape) == 0 or leading < num_chunks:
        num_chunks = 1
    bounds = _chunk_bounds(leading, num_chunks) if num_chunks > 1 else ()

    def _copy_kernel(src_hbm_ref, dst_hbm_ref, sems):
        if num_chunks == 1:
            # Single direct HBM->HBM DMA: no VMEM staging, no vld/vst through
            # vregs — bounded purely by HBM bandwidth on all generations.
            cp = pltpu.make_async_copy(src_hbm_ref, dst_hbm_ref, sems.at[0])
            cp.start()
            cp.wait()
        else:
            # Several concurrent DMAs along the leading axis: start all, then
            # wait all, keeping multiple descriptors in flight.
            copies = []
            for i in range(num_chunks):
                start, size = bounds[i]
                cp = pltpu.make_async_copy(
                    src_hbm_ref.at[pl.ds(start, size)],
                    dst_hbm_ref.at[pl.ds(start, size)],
                    sems.at[i],
                )
                cp.start()
                copies.append(cp)
            for cp in copies:
                cp.wait()

    call = pl.pallas_call(
        _copy_kernel,
        out_shape=jax.ShapeDtypeStruct(shape, dtype),
        in_specs=[pl.BlockSpec(memory_space=pl.ANY)],
        out_specs=pl.BlockSpec(memory_space=pl.ANY),
        scratch_shapes=[pltpu.SemaphoreType.DMA((max(num_chunks, 1),))],
    )
    return jax.jit(call)


def hamiltonian_config_copy(config: jax.Array, num_chunks: int | None = None) -> jax.Array:
    """Debug/verification path: exact device-side copy of `config`.

    Works for arbitrary shapes/dtypes (no (8,128) padding requirement) because
    the copy is a raw HBM->HBM DMA rather than a tiled VMEM pipeline.  Large
    arrays are copied with several concurrent chunked DMAs.
    """
    config = jnp.asarray(config)
    if num_chunks is None:
        nbytes = config.size * config.dtype.itemsize
        if nbytes >= _CHUNK_THRESHOLD_BYTES and config.ndim >= 1:
            num_chunks = min(_MAX_CHUNKS, max(1, config.shape[0]))
        else:
            num_chunks = 1
    fn = _build_copy(tuple(config.shape), config.dtype.name, int(num_chunks))
    return fn(config)


class Hamiltonian:
    """JAX/Pallas port of the PyTorch `Hamiltonian` module."""

    def __init__(self, debug_device_copy: bool = False):
        # Reference __init__ defines no parameters; nothing to initialize.
        # `debug_device_copy=True` optionally exercises the Pallas DMA-copy
        # kernel (plumbing tests only); default is OFF since the result is
        # unused and the reference forward does no work.
        self._debug_device_copy = debug_device_copy

    def forward(self, config):
        # Reference forward body is `pass` -> returns None.  The production
        # path launches no kernel.  The debug branch dispatches the cached,
        # jitted copy asynchronously — no block_until_ready, so it never
        # drains the device queue.  (If this were traced under jax.jit the
        # dead copy would simply be DCE'd, which matches the reference
        # no-op semantics.)
        if self._debug_device_copy:
            hamiltonian_config_copy(config)
        return None

    __call__ = forward


if __name__ == "__main__":
    key = jax.random.PRNGKey(0)

    # Small VMC-style configuration batch: 8 samples x 128 sites (+-1 spins).
    config = jnp.where(
        jax.random.uniform(key, (8, 128)) > 0.5, 1.0, -1.0
    ).astype(jnp.float32)

    # Run the (debug) Pallas HBM->HBM copy kernel once and verify it.
    out = jax.block_until_ready(hamiltonian_config_copy(config))
    assert out.shape == config.shape and out.dtype == config.dtype
    assert bool(jnp.all(out == config))

    # Second call hits the cached jitted executable (no re-trace).
    out2 = jax.block_until_ready(hamiltonian_config_copy(config))
    assert bool(jnp.all(out2 == config))

    # Arbitrary (non-(8,128)-aligned) shapes are accepted — no padding needed.
    key2 = jax.random.PRNGKey(1)
    odd_config = jnp.where(
        jax.random.uniform(key2, (5, 100)) > 0.5, 1.0, -1.0
    ).astype(jnp.float32)
    odd_out = jax.block_until_ready(hamiltonian_config_copy(odd_config))
    assert odd_out.shape == odd_config.shape
    assert bool(jnp.all(odd_out == odd_config))

    # Exercise the multi-DMA chunked path explicitly on a small array.
    key3 = jax.random.PRNGKey(2)
    chunk_config = jnp.where(
        jax.random.uniform(key3, (32, 256)) > 0.5, 1.0, -1.0
    ).astype(jnp.float32)
    chunk_out = jax.block_until_ready(
        hamiltonian_config_copy(chunk_config, num_chunks=4)
    )
    assert bool(jnp.all(chunk_out == chunk_config))

    # Module-level semantics: forward returns None (no kernel launched),
    # exactly like the reference module.
    ham = Hamiltonian()
    result = ham(config)
    assert result is None

    # Debug path still works when explicitly requested (async dispatch,
    # no host sync inside forward).
    ham_dbg = Hamiltonian(debug_device_copy=True)
    assert ham_dbg(config) is None

    print("KERNEL_OK")
</pallas_src>

<mosaic_0001>
module attributes {stable_mosaic.version = 11 : i64} {
  func.func @_copy_kernel(%arg0: memref<8x128xf32, #tpu.memory_space<any>>, %arg1: memref<8x128xf32, #tpu.memory_space<any>>, %arg2: memref<1x!tpu.dma_semaphore, #tpu.memory_space<semaphore_mem>>) attributes {dimension_semantics = [], scalar_prefetch = 0 : i64, scratch_operands = 1 : i64, tpu.core_type = #tpu.core_type<tc>} {
    %c0_i32 = arith.constant 0 : i32
    %0 = tpu.memref_slice %arg2[%c0_i32] : memref<1x!tpu.dma_semaphore, #tpu.memory_space<semaphore_mem>> -> memref<1x!tpu.dma_semaphore, #tpu.memory_space<semaphore_mem>>
    %1 = tpu.memref_squeeze %0 : memref<1x!tpu.dma_semaphore, #tpu.memory_space<semaphore_mem>> -> memref<!tpu.dma_semaphore, #tpu.memory_space<semaphore_mem>>
    tpu.enqueue_dma source(%arg0 : memref<8x128xf32, #tpu.memory_space<any>>) target(%arg1 : memref<8x128xf32, #tpu.memory_space<any>>) target_semaphore(%1 : memref<!tpu.dma_semaphore, #tpu.memory_space<semaphore_mem>>)
    %c0_i32_0 = arith.constant 0 : i32
    %2 = tpu.memref_slice %arg2[%c0_i32_0] : memref<1x!tpu.dma_semaphore, #tpu.memory_space<semaphore_mem>> -> memref<1x!tpu.dma_semaphore, #tpu.memory_space<semaphore_mem>>
    %3 = tpu.memref_squeeze %2 : memref<1x!tpu.dma_semaphore, #tpu.memory_space<semaphore_mem>> -> memref<!tpu.dma_semaphore, #tpu.memory_space<semaphore_mem>>
    tpu.wait_dma2 semaphore(%3 : memref<!tpu.dma_semaphore, #tpu.memory_space<semaphore_mem>>) src(%arg0 : memref<8x128xf32, #tpu.memory_space<any>>) dst(%arg1 : memref<8x128xf32, #tpu.memory_space<any>>)
    return
  }
}

</mosaic_0001>

<llo_original>
// kernel: tpu_custom_call.1
$region0: #{tpu_custom_call.1}
  #allocation0 [shape = 'u32[]', space=smem, size = 0x4, offset = 0x4, fixed_abs, tag = 'smem constant byte address 0x4 - core index']
  #allocation1 [shape = 'u32[72,128]{1,0:T(1,128)}', space=vmem, size = 0x9000, scoped, tag = 'internal scratch']
  #allocation2 [shape = 's32[1]{0}', space=sflag, size = 0x4, scoped, tag = 'scratch operand']
  #allocation3 [shape = 's32[]', space=sflag, size = 0x4, offset = 0, fixed_abs, tag = 'sflag constant byte address 0x0 - dummy sync flag']
  #allocation4 [shape = 'u32[0]{0}', space=smem, size = 0, offset = 0, fixed_abs, tag = 'smem constant byte address 0x0 - null']
  %s0 = inlined_call_operand.hbm [shape: f32[8,128], index: 0, kind: input, shape index: {}]
  %s1 = inlined_call_operand.hbm [shape: f32[8,128], index: 1, kind: output, shape index: {}]
  %s2 = sld [smem:[#allocation0]]
  $region2: #{tpu_custom_call.1} parent=0
    _
  %s4 = ssub.s32 1, %s2
  %s5 = scalar_select 0, %s4, %s2
  %s7 = sshll.u32 1, 14
  %s8 = sxor.u32 4294967295, %s7
  %s10 = sshll.u32 %s0, 4
  %s11 = int_to_ptr.hbm [resolvable:$true] %s10
  %s12 = sshll.u32 %s1, 4
  %s13 = int_to_ptr.hbm [resolvable:$true] %s12
  %16 = dma.general %s11, 128, %s13, [#allocation2], [#allocation3], [#allocation4], 0, 0
  %s17 = smul.u32 8, 1
  %s18 = sshll.u32 %s17, 4
  %19 = dma.done [#allocation2], %s18
  %20 = vsyncmov [#allocation2]
  %s21 = vpop.sfrf %20
  %p22 = scmp.eq.s32.totalorder %s21, 0
  %p23 = pneg %p22
  %25 = shalt.err (%p23)

</llo_original>
